<compile_context>
chip_gen: v5e
topology: v5e:2x2
jax: 0.10.0
libtpu: 0.0.40
codegen_flags: <defaults>
</compile_context>

<pallas_src>
import functools
import math

import jax
import jax.numpy as jnp
from jax.experimental import pallas as pl
from jax.experimental.pallas import tpu as pltpu


def _round_up(x, m):
    return (x + m - 1) // m * m


def _hw_defaults():
    """Tile / VMEM defaults per TPU generation."""
    kind = ""
    try:
        kind = jax.devices()[0].device_kind.lower()
    except Exception:
        pass
    if "v7" in kind or "7x" in kind:
        # v7x: only 64 MiB VMEM per TensorCore, 2 TCs -> smaller tiles,
        # <=48 MiB scoped, and prefer >= 2 parallel (M, N) tiles.
        return dict(tm=256, tn=512, tk=512, vmem=48 * 1024 * 1024, split=True)
    # v5e / v6e: 128 MiB VMEM, HBM-bandwidth bound -> large tiles to cut
    # operand re-reads (weight traffic ~ grid_M, x traffic ~ grid_N).
    return dict(tm=512, tn=512, tk=1024, vmem=64 * 1024 * 1024, split=False)


# -----------------------------------------------------------------------------
# Kernels
# -----------------------------------------------------------------------------
def _masked_linear_tiled_kernel(*refs, has_mask, has_bias):
    """Grid (M, N, K); K innermost reduction with a resident f32 accumulator."""
    idx = 0
    x_ref = refs[idx]; idx += 1                       # (tm, tk)
    w_ref = refs[idx]; idx += 1                       # (tn, tk)
    m_ref = None
    if has_mask:
        m_ref = refs[idx]; idx += 1                   # (tn, tk)
    b_ref = None
    if has_bias:
        b_ref = refs[idx]; idx += 1                   # (1, tn)
    o_ref = refs[idx]; idx += 1                       # (tm, tn)
    acc_ref = refs[idx]                               # (tm, tn) f32 scratch

    k = pl.program_id(2)
    last = k == pl.num_programs(2) - 1

    wm = w_ref[...]
    if has_mask:
        # VPU mask-mul in the (narrow) weight dtype; masked weights stay
        # exactly zero in bf16 too.
        wm = wm * m_ref[...].astype(wm.dtype)

    # MXU: contract the LAST dim of both tiles (x @ w.T without any transpose;
    # this is the MXU-native "rhs transposed" form, no per-step XLU vxpose).
    part = jax.lax.dot_general(
        x_ref[...], wm,
        dimension_numbers=(((1,), (1,)), ((), ())),
        preferred_element_type=jnp.float32)           # (tm, tn) f32

    @pl.when(k == 0)
    def _():
        acc_ref[...] = jnp.zeros_like(acc_ref)

    @pl.when(jnp.logical_not(last))
    def _():
        acc_ref[...] += part

    # Epilogue fused with the final partial product: one acc read, one store.
    @pl.when(last)
    def _():
        res = acc_ref[...] + part
        if has_bias:
            res = res + b_ref[...].astype(jnp.float32)
        o_ref[...] = res.astype(o_ref.dtype)


def _masked_linear_small_kernel(*refs, has_mask, has_bias):
    """Single full-array block (no grid) for problems that fit one tile."""
    idx = 0
    x_ref = refs[idx]; idx += 1
    w_ref = refs[idx]; idx += 1
    m_ref = None
    if has_mask:
        m_ref = refs[idx]; idx += 1
    b_ref = None
    if has_bias:
        b_ref = refs[idx]; idx += 1
    o_ref = refs[idx]

    wm = w_ref[...]
    if has_mask:
        wm = wm * m_ref[...].astype(wm.dtype)
    res = jax.lax.dot_general(
        x_ref[...], wm,
        dimension_numbers=(((1,), (1,)), ((), ())),
        preferred_element_type=jnp.float32)
    if has_bias:
        res = res + b_ref[...].astype(jnp.float32)
    o_ref[...] = res.astype(o_ref.dtype)


# -----------------------------------------------------------------------------
# Wrapper
# -----------------------------------------------------------------------------
def masked_linear(x, weight, mask=None, bias=None, *, mxu_dtype=jnp.bfloat16,
                  tm=None, tn=None, tk=None):
    """y = x @ (weight * mask).T + bias  (matches torch.nn.functional.linear).

    mask=None means the pruning mask is already folded into `weight`
    (recommended when the mask is static: saves the mask DMA + per-step mul).
    mxu_dtype=jnp.bfloat16 (default) feeds the MXU/HBM in bf16 with f32
    accumulation; pass mxu_dtype=None for an all-f32 path.
    """
    M, K = x.shape
    N, K2 = weight.shape
    assert K == K2
    if mask is not None:
        assert mask.shape == weight.shape
    out_dtype = x.dtype
    has_mask = mask is not None
    has_bias = bias is not None

    # Feed the MXU (and HBM) in bf16: halves x/weight bytes and avoids the
    # slow f32 MXU mode. Integer (e.g. int8 0/1) masks are kept narrow.
    if mxu_dtype is not None:
        if x.dtype != mxu_dtype:
            x = x.astype(mxu_dtype)
        if weight.dtype != mxu_dtype:
            weight = weight.astype(mxu_dtype)
        if has_mask and jnp.issubdtype(mask.dtype, jnp.floating) \
                and mask.dtype != mxu_dtype:
            mask = mask.astype(mxu_dtype)

    hw = _hw_defaults()
    tm = hw["tm"] if tm is None else tm
    tn = hw["tn"] if tn is None else tn
    tk = hw["tk"] if tk is None else tk

    # ---- Small-shape fallback: one full-array block, no padding, no grid ----
    if M <= tm and N <= tn and K <= tk:
        args = [x, weight]
        if has_mask:
            args.append(mask.astype(weight.dtype))    # tiny; simplest layout
        if has_bias:
            args.append(bias.reshape(1, N))
        return pl.pallas_call(
            functools.partial(_masked_linear_small_kernel,
                              has_mask=has_mask, has_bias=has_bias),
            out_shape=jax.ShapeDtypeStruct((M, N), out_dtype),
        )(*args)

    # ---- Tiled path ---------------------------------------------------------
    # Lane-dense tiles: tn/tk multiples of 128 (defaults are 256/512 multiples
    # for the 256x256 MXUs on v6e/v7x), tm multiple of 8; clamp to the problem.
    tm = min(tm, _round_up(M, 8))
    tn = min(tn, _round_up(N, 128))
    tk = min(tk, _round_up(K, 128))

    # v7x: make sure both TensorCores get work (>= 2 parallel (M, N) tiles).
    if hw["split"]:
        while (_round_up(M, tm) // tm) * (_round_up(N, tn) // tn) < 2 and tn > 128:
            tn //= 2

    Mp, Np, Kp = _round_up(M, tm), _round_up(N, tn), _round_up(K, tk)

    # Zero-pad ragged dims so every block load/store is full-size. Padding
    # along K contributes exact zeros to the accumulator.  For static
    # parameters prefer padding/casting ONCE at prune time (each per-call pad
    # is a full extra HBM pass over the parameter).
    if (Mp, Kp) != (M, K):
        x = jnp.pad(x, ((0, Mp - M), (0, Kp - K)))
    if (Np, Kp) != (N, K):
        weight = jnp.pad(weight, ((0, Np - N), (0, Kp - K)))
        if has_mask:
            mask = jnp.pad(mask, ((0, Np - N), (0, Kp - K)))
    if has_bias and Np != N:
        bias = jnp.pad(bias, (0, Np - N))

    grid = (Mp // tm, Np // tn, Kp // tk)

    in_specs = [
        pl.BlockSpec((tm, tk), lambda i, j, k: (i, k)),       # x
        pl.BlockSpec((tn, tk), lambda i, j, k: (j, k)),       # weight
    ]
    args = [x, weight]
    if has_mask:
        in_specs.append(pl.BlockSpec((tn, tk), lambda i, j, k: (j, k)))
        args.append(mask)
    if has_bias:
        in_specs.append(pl.BlockSpec((1, tn), lambda i, j, k: (0, j)))
        args.append(bias.reshape(1, Np))

    y = pl.pallas_call(
        functools.partial(_masked_linear_tiled_kernel,
                          has_mask=has_mask, has_bias=has_bias),
        out_shape=jax.ShapeDtypeStruct((Mp, Np), out_dtype),
        grid_spec=pltpu.PrefetchScalarGridSpec(
            num_scalar_prefetch=0,
            grid=grid,
            in_specs=in_specs,
            out_specs=pl.BlockSpec((tm, tn), lambda i, j, k: (i, j)),
            scratch_shapes=[pltpu.VMEM((tm, tn), jnp.float32)],
        ),
        compiler_params=pltpu.CompilerParams(
            # M/N tiles independent -> "parallel" (v7x 2-TC sharding);
            # K is the reduction with a resident output block -> "arbitrary".
            dimension_semantics=("parallel", "parallel", "arbitrary"),
            vmem_limit_bytes=hw["vmem"],
        ),
    )(*args)

    if (Mp, Np) != (M, N):
        y = y[:M, :N]
    return y


if __name__ == "__main__":
    # ---- Module-spec demo: in_features=32, out_features=16, batch=8 ---------
    in_features, out_features, batch = 32, 16, 8
    key = jax.random.PRNGKey(0)
    kx, kw, kb, kx2, kw2, kb2 = jax.random.split(key, 6)

    # reset_parameters(): uniform(-stdv, stdv)
    stdv = 1.0 / math.sqrt(in_features)
    weight = jax.random.uniform(kw, (out_features, in_features),
                                minval=-stdv, maxval=stdv, dtype=jnp.float32)
    bias = jax.random.uniform(kb, (out_features,),
                              minval=-stdv, maxval=stdv, dtype=jnp.float32)
    # prune(threshold): 0/1 mask, stored int8 (4x less HBM traffic than f32).
    mask = (jnp.abs(weight) >= 0.5 * stdv).astype(jnp.int8)
    x = jax.random.normal(kx, (batch, in_features), dtype=jnp.float32)

    y_ref = x @ (weight * mask.astype(jnp.float32)).T + bias

    # 1) small-shape path, fused mask, all-f32 (tight check).
    y = jax.block_until_ready(masked_linear(x, weight, mask, bias,
                                            mxu_dtype=None))
    assert y.shape == (batch, out_features)
    assert jnp.allclose(y, y_ref, atol=1e-4, rtol=1e-4), "f32 small mismatch"

    # 2) small-shape path, static mask folded into weight, default bf16 feed.
    w_pruned = weight * mask.astype(jnp.float32)
    y2 = jax.block_until_ready(masked_linear(x, w_pruned, None, bias))
    assert jnp.allclose(y2, y_ref, atol=5e-2, rtol=5e-2), "bf16 small mismatch"

    # ---- Exercise the tiled path on modest aligned shapes (grid 2x2x2) ------
    M2, K2, N2 = 256, 512, 512
    stdv2 = 1.0 / math.sqrt(K2)
    w2 = jax.random.uniform(kw2, (N2, K2), minval=-stdv2, maxval=stdv2,
                            dtype=jnp.float32)
    b2 = jax.random.uniform(kb2, (N2,), minval=-stdv2, maxval=stdv2,
                            dtype=jnp.float32)
    m2 = (jnp.abs(w2) >= 0.5 * stdv2).astype(jnp.int8)
    x2 = jax.random.normal(kx2, (M2, K2), dtype=jnp.float32)
    y2_ref = x2 @ (w2 * m2.astype(jnp.float32)).T + b2

    # 3) tiled, fused int8 mask, bf16-fed MXU (default).
    y3 = jax.block_until_ready(
        masked_linear(x2, w2, m2, b2, tm=128, tn=256, tk=256))
    assert y3.shape == (M2, N2)
    assert jnp.allclose(y3, y2_ref, atol=5e-2, rtol=5e-2), "bf16 tiled mismatch"

    # 4) tiled, all-f32 (checks accumulator init / fused epilogue exactly).
    y4 = jax.block_until_ready(
        masked_linear(x2, w2, m2, b2, mxu_dtype=None, tm=128, tn=256, tk=256))
    assert jnp.allclose(y4, y2_ref, atol=1e-3, rtol=1e-3), "f32 tiled mismatch"

    print("KERNEL_OK")
</pallas_src>

<mosaic_0001>
module attributes {stable_mosaic.version = 11 : i64} {
  func.func @_masked_linear_small_kernel(%arg0: memref<8x32xf32, #tpu.memory_space<vmem>>, %arg1: memref<16x32xf32, #tpu.memory_space<vmem>>, %arg2: memref<16x32xf32, #tpu.memory_space<vmem>>, %arg3: memref<1x16xf32, #tpu.memory_space<vmem>>, %arg4: memref<8x16xf32, #tpu.memory_space<vmem>>) attributes {dimension_semantics = [], scalar_prefetch = 0 : i64, scratch_operands = 0 : i64, tpu.core_type = #tpu.core_type<tc>} {
    %c0 = arith.constant 0 : index
    %c0_0 = arith.constant 0 : index
    %0 = vector.load %arg1[%c0, %c0_0] : memref<16x32xf32, #tpu.memory_space<vmem>>, vector<16x32xf32>
    %c0_1 = arith.constant 0 : index
    %c0_2 = arith.constant 0 : index
    %1 = vector.load %arg2[%c0_1, %c0_2] : memref<16x32xf32, #tpu.memory_space<vmem>>, vector<16x32xf32>
    %2 = arith.mulf %0, %1 : vector<16x32xf32>
    %c0_3 = arith.constant 0 : index
    %c0_4 = arith.constant 0 : index
    %3 = vector.load %arg0[%c0_3, %c0_4] : memref<8x32xf32, #tpu.memory_space<vmem>>, vector<8x32xf32>
    %cst = arith.constant dense<0.000000e+00> : vector<8x16xf32>
    %4 = tpu.matmul %3, %2, %cst {dimension_numbers = #tpu.dot_dimension_numbers<[1], [1], [0], [0], [0, 0, 1, 0], [], []>} : vector<8x32xf32>, vector<16x32xf32>, vector<8x16xf32> -> vector<8x16xf32>
    %c0_5 = arith.constant 0 : index
    %c0_6 = arith.constant 0 : index
    %5 = vector.load %arg3[%c0_5, %c0_6] : memref<1x16xf32, #tpu.memory_space<vmem>>, vector<1x16xf32>
    %6 = vector.broadcast %5 : vector<1x16xf32> to vector<8x16xf32>
    %7 = arith.addf %4, %6 : vector<8x16xf32>
    %c0_7 = arith.constant 0 : index
    %c0_8 = arith.constant 0 : index
    %8 = vector.load %arg4[%c0_7, %c0_8] : memref<8x16xf32, #tpu.memory_space<vmem>>, vector<8x16xf32>
    tpu.vector_store %arg4[%c0_7, %c0_8], %7 {strides = array<i32>} : memref<8x16xf32, #tpu.memory_space<vmem>>, vector<8x16xf32>,
    return
  }
}

</mosaic_0001>

<llo_original>
// kernel: tpu_custom_call.1
$region0: #{tpu_custom_call.1}
  #allocation0 [shape = 'u32[]', space=smem, size = 0x4, offset = 0x4, fixed_abs, tag = 'smem constant byte address 0x4 - core index']
  #allocation1 [shape = 'u32[72,128]{1,0:T(1,128)}', space=vmem, size = 0x9000, scoped, tag = 'internal scratch']
  %s0 = inlined_call_operand.hbm [shape: f32[8,32], index: 0, kind: input, shape index: {}]
  %s1 = inlined_call_operand.hbm [shape: f32[16,32], index: 1, kind: input, shape index: {}]
  %s2 = inlined_call_operand.hbm [shape: f32[16,32], index: 2, kind: input, shape index: {}]
  %s3 = inlined_call_operand.vmem [shape: f32[1,16], index: 3, kind: input, shape index: {}]
  %s4 = inlined_call_operand.hbm [shape: f32[8,16], index: 4, kind: output, shape index: {}]
  %s5 = sld [smem:[#allocation0]]
  $region38: #{tpu_custom_call.1} parent=0
    _
  %s7 = ssub.s32 1, %s5
  %s8 = scalar_select 0, %s7, %s5
  $region1: #{tpu_custom_call.1} parent=0
    #allocation2 [shape = 'u8[4096]{0}', space=vmem, size = 0x1000, scoped, tag = 'input window, operand 0, single buffered']
    #allocation3 [shape = 's32[1]{0}', space=sflag, size = 0x4, scoped, tag = 'scoped memory for tpu_custom_call.1']
    #allocation4 [shape = 's32[1]{0}', space=sflag, size = 0x4, scoped, tag = 'scoped memory for tpu_custom_call.1']
    #allocation5 [shape = 'u8[8192]{0}', space=vmem, size = 0x2000, scoped, tag = 'input window, operand 1, single buffered']
    #allocation6 [shape = 's32[1]{0}', space=sflag, size = 0x4, scoped, tag = 'scoped memory for tpu_custom_call.1']
    #allocation7 [shape = 'u8[8192]{0}', space=vmem, size = 0x2000, scoped, tag = 'input window, operand 2, single buffered']
    #allocation8 [shape = 'u8[4096]{0}', space=vmem, size = 0x1000, scoped, tag = 'output window, operand 0, single buffered']
    %9 = vsyncpa [#allocation3], 0
    %10 = vsyncpa [#allocation6], 0
    %11 = vsyncpa [#allocation4], 0
    // Predicated region
    $region2: #{tpu_custom_call.1} parent=1 // pred_check
      _
    $region3: #{tpu_custom_call.1} parent=1 // pred_check_branch
      %13 = sbr.rel (0) target = $region5
    $region4: #{tpu_custom_call.1} parent=1 // pred_region
      %15 = vsyncadd [#allocation3], 0
      %s17 = sshll.u32 %s0, 4
      %s18 = int_to_ptr.hbm [resolvable:$true] %s17
      %s19 = sshll.u32 [#allocation2], 4
      %s20 = int_to_ptr.vmem [resolvable:$true] %s19
      %22 = dma.hbm_to_vmem [thread:$0]  %s18, 128, %s20, [#allocation3]
    $region5: #{tpu_custom_call.1} parent=1 // pred_fallthru
      _
    // Predicated region
    $region6: #{tpu_custom_call.1} parent=1 // pred_check
      _
    $region7: #{tpu_custom_call.1} parent=1 // pred_check_branch
      %24 = sbr.rel (0) target = $region9
    $region8: #{tpu_custom_call.1} parent=1 // pred_region
      %26 = vsyncadd [#allocation6], 0
      %s27 = sshll.u32 %s1, 4
      %s28 = int_to_ptr.hbm [resolvable:$true] %s27
      %s29 = sshll.u32 [#allocation5], 4
      %s30 = int_to_ptr.vmem [resolvable:$true] %s29
      %35 = dma.hbm_to_vmem [thread:$0]  %s28, 256, %s30, [#allocation6], 128, 128, 8
    $region9: #{tpu_custom_call.1} parent=1 // pred_fallthru
      _
    // Predicated region
    $region10: #{tpu_custom_call.1} parent=1 // pred_check
      _
    $region11: #{tpu_custom_call.1} parent=1 // pred_check_branch
      %37 = sbr.rel (0) target = $region13
    $region12: #{tpu_custom_call.1} parent=1 // pred_region
      %39 = vsyncadd [#allocation6], 0
      %s40 = sshll.u32 %s2, 4
      %s41 = int_to_ptr.hbm [resolvable:$true] %s40
      %s42 = sshll.u32 [#allocation7], 4
      %s43 = int_to_ptr.vmem [resolvable:$true] %s42
      %48 = dma.hbm_to_vmem [thread:$0]  %s41, 256, %s43, [#allocation6], 128, 128, 8
    $region13: #{tpu_custom_call.1} parent=1 // pred_fallthru
      _
    // Predicated region
    $region14: #{tpu_custom_call.1} parent=1 // pred_check
      _
    $region15: #{tpu_custom_call.1} parent=1 // pred_check_branch
      %50 = sbr.rel (0) target = $region17
    $region16: #{tpu_custom_call.1} parent=1 // pred_region
      _
    $region17: #{tpu_custom_call.1} parent=1 // pred_fallthru
      _
    // Predicated region
    $region18: #{tpu_custom_call.1} parent=1 // pred_check
      _
    $region19: #{tpu_custom_call.1} parent=1 // pred_check_branch
      %52 = sbr.rel (0) target = $region21
    $region20: #{tpu_custom_call.1} parent=1 // pred_region
      %54 = dma.done [#allocation3], 128
    $region21: #{tpu_custom_call.1} parent=1 // pred_fallthru
      _
    // Predicated region
    $region22: #{tpu_custom_call.1} parent=1 // pred_check
      _
    $region23: #{tpu_custom_call.1} parent=1 // pred_check_branch
      %56 = sbr.rel (0) target = $region25
    $region24: #{tpu_custom_call.1} parent=1 // pred_region
      %58 = dma.done [#allocation6], 256
    $region25: #{tpu_custom_call.1} parent=1 // pred_fallthru
      _
    // Predicated region
    $region26: #{tpu_custom_call.1} parent=1 // pred_check
      _
    $region27: #{tpu_custom_call.1} parent=1 // pred_check_branch
      %60 = sbr.rel (0) target = $region29
    $region28: #{tpu_custom_call.1} parent=1 // pred_region
      %62 = dma.done [#allocation6], 256
    $region29: #{tpu_custom_call.1} parent=1 // pred_fallthru
      _
    %v63 = vld [vmem:[#allocation5] sm:$0xff]
    %v64 = vld [vmem:[#allocation5 + $0x8] sm:$0xff]
    %v65 = vld [vmem:[#allocation7] sm:$0xff]
    %v66 = vld [vmem:[#allocation7 + $0x8] sm:$0xff]
    %v67 = vmul.f32 %v63, %v65
    %v68 = vmul.f32 %v64, %v66
    %v69 = vld [vmem:[#allocation2] sm:$0xff]
    %v70 = vld [vmem:[%s3] sm:$0x1]
    %v72 = vperm.slane %v70, 0
    %vm74 = vcmask 261120
    %v76 = vsel %vm74, %v69, 0
    %v79 = vsel %vm74, %v67, 0
    %v82 = vsel %vm74, %v68, 0
    %84 = vmatpush.xpose.msra.mxu0 0.0
    %85 = vmatpush.xpose.msra.mxu0 0.0
    %86 = vmatpush.xpose.msra.mxu0 0.0
    %87 = vmatpush.xpose.msra.mxu0 0.0
    %88 = vmatpush.xpose.msra.mxu0 0.0
    %89 = vmatpush.xpose.msra.mxu0 0.0
    %90 = vmatpush.xpose.msra.mxu0 0.0
    %91 = vmatpush.xpose.msra.mxu0 0.0
    %92 = vmatpush.xpose.msra.mxu0 0.0
    %93 = vmatpush.xpose.msra.mxu0 0.0
    %94 = vmatpush.xpose.msra.mxu0 0.0
    %95 = vmatpush.xpose.msra.mxu0 0.0
    %96 = vmatpush.xpose.msra.mxu0 0.0
    %97 = vmatpush.xpose.msra.mxu0 0.0
    %98 = vmatpush.xpose.msra.mxu0 %v82
    %99 = vmatpush.xpose.msra.mxu0 %v79
    %100 = vmatmul.f32.gmra.mxu0 %v76
    %v101 = vpop.f32.mrf.mxu0
    %v102 = vadd.f32 %v72, %v101
    %103 = vdwg.mxu0
    %vm104 = vcmask 130048
    %105 = vst.msk [vmem:[#allocation8] sm:$0xff] %vm104, %v102
    // Predicated region
    $region30: #{tpu_custom_call.1} parent=1 // pred_check
      _
    $region31: #{tpu_custom_call.1} parent=1 // pred_check_branch
      %107 = sbr.rel (0) target = $region33
    $region32: #{tpu_custom_call.1} parent=1 // pred_region
      %109 = vsyncadd [#allocation4], 0
      %s111 = sshll.u32 [#allocation8], 4
      %s112 = int_to_ptr.vmem [resolvable:$true] %s111
      %s113 = sshll.u32 %s4, 4
      %s114 = int_to_ptr.hbm [resolvable:$true] %s113
      %116 = dma.vmem_to_hbm [thread:$0]  %s112, 128, %s114, [#allocation4]
    $region33: #{tpu_custom_call.1} parent=1 // pred_fallthru
      _
    // Predicated region
    $region34: #{tpu_custom_call.1} parent=1 // pred_check
      _
    $region35: #{tpu_custom_call.1} parent=1 // pred_check_branch
      %118 = sbr.rel (0) target = $region37
    $region36: #{tpu_custom_call.1} parent=1 // pred_region
      %120 = dma.done [#allocation4], 128
    $region37: #{tpu_custom_call.1} parent=1 // pred_fallthru
      _
    %121 = vsyncpa [#allocation3], 1
    %122 = vsyncpa [#allocation6], 1
    %123 = vsyncpa [#allocation4], 1

</llo_original>
